<compile_context>
chip_gen: v5e
topology: v5e:2x2
jax: 0.10.0
libtpu: 0.0.40
codegen_flags: <defaults>
</compile_context>

<pallas_src>
import functools

import jax
import jax.numpy as jnp
from jax.experimental import pallas as pl
from jax.experimental.pallas import tpu as pltpu


def _round_up(x, m):
    return ((x + m - 1) // m) * m


@functools.lru_cache(maxsize=1)
def _vmem_capacity_bytes():
    try:
        cap = int(pltpu.get_tpu_info().vmem_capacity_bytes)
        if cap > 0:
            return cap
    except Exception:
        pass
    return 64 * 1024 * 1024  # conservative fallback (v7x per-TensorCore VMEM)


# ----------------------------------------------------------------------------
# Kernels
# ----------------------------------------------------------------------------

def _linear_single_kernel(x_ref, w_ref, b_ref, o_ref):
    # Whole K in one block: a single MXU pass, bias fused, direct store.
    acc = jnp.dot(x_ref[...], w_ref[...], preferred_element_type=jnp.float32)
    o_ref[...] = (acc + b_ref[...].astype(jnp.float32)).astype(o_ref.dtype)


def _linear_acc_inplace_kernel(x_ref, w_ref, b_ref, o_ref):
    # K split, f32 output: o_ref is VMEM-resident across the K axis, so
    # accumulate directly into it (no scratch, no final copy).
    @pl.when(pl.program_id(1) == 0)
    def _():
        o_ref[...] = jnp.broadcast_to(b_ref[...].astype(o_ref.dtype),
                                      o_ref.shape)

    o_ref[...] += jnp.dot(x_ref[...], w_ref[...],
                          preferred_element_type=jnp.float32)


def _linear_acc_scratch_kernel(x_ref, w_ref, b_ref, o_ref, acc_ref):
    # K split, non-f32 output: accumulate in f32 scratch, cast on last step.
    k = pl.program_id(1)

    @pl.when(k == 0)
    def _():
        acc_ref[...] = jnp.broadcast_to(b_ref[...].astype(jnp.float32),
                                        acc_ref.shape)

    acc_ref[...] += jnp.dot(x_ref[...], w_ref[...],
                            preferred_element_type=jnp.float32)

    @pl.when(k == pl.num_programs(1) - 1)
    def _():
        o_ref[...] = acc_ref[...].astype(o_ref.dtype)


# ----------------------------------------------------------------------------
# Tiling heuristics
# ----------------------------------------------------------------------------

def _choose_out_width(n):
    """Lane-dense padding only when the inflation is <= 2x.  Tiny
    out_features (e.g. 16 in BLSTM) keep their true width and rely on masked
    stores instead of 8x-inflated weight/output HBM traffic + a post-slice."""
    n_lane = _round_up(n, 128)
    if n == n_lane or 2 * n >= n_lane:
        return n_lane
    return n


def _choose_block_k(k, n_out, w_bytes, budget):
    """Prefer tk == K (weight fetched once, VMEM-resident, single accumulator
    pass per row tile).  Split K only when the weight block cannot fit half
    the VMEM budget, using large MXU-friendly chunks that divide K evenly."""
    n_lane = _round_up(n_out, 128)

    def w_buf(tk):  # conservative: assume double-buffer even for constant idx
        return 2 * _round_up(tk, 8) * n_lane * w_bytes

    if w_buf(k) <= budget // 2:
        return k
    for tk in (4096, 2048, 1024, 512, 256):
        if k % tk == 0 and w_buf(tk) <= budget // 2:
            return tk
    return k  # last resort: keep full K; vmem_limit is raised accordingly


def _choose_block_m(m_al, tk, n_out, x_bytes, out_bytes, w_bytes,
                    use_scratch, sub, budget):
    # VMEM layout pads the lane dim to 128 / sublane to 8 -> account for it.
    n_lane = _round_up(n_out, 128)
    k_lane = _round_up(tk, 128)
    fixed = 2 * _round_up(tk, 8) * n_lane * w_bytes        # weight buffers
    fixed += 2 * 8 * n_lane * 4                            # bias buffers
    per_row = 2 * k_lane * x_bytes                         # x double-buffer
    per_row += 2 * n_lane * out_bytes                      # out double-buffer
    if use_scratch:
        per_row += n_lane * 4                              # f32 accumulator
    avail = max(budget - fixed, per_row * sub)
    tm = min(avail // per_row, 4096, m_al)
    # Keep >= 2 row tiles whenever M allows so the "parallel" axis can be
    # split across TensorCores (v7x megacore); costs at most one extra step.
    if m_al >= 2 * sub:
        tm = min(tm, _round_up(pl.cdiv(m_al, 2), sub))
    # MXU-friendly granularity: multiples of 256 when large, else sublane.
    if tm >= 512:
        tm = (tm // 256) * 256
    else:
        tm = (tm // sub) * sub
    return max(int(tm), sub)


# ----------------------------------------------------------------------------
# pallas_call wrapper
# ----------------------------------------------------------------------------

def _linear_pallas(x2d, weight, bias):
    """y = x2d @ weight.T + bias (nn.Linear), row-tiled Pallas matmul."""
    m, k = x2d.shape
    n = weight.shape[0]
    out_dtype = x2d.dtype
    x_bytes = x2d.dtype.itemsize
    w_bytes = weight.dtype.itemsize
    out_bytes = x2d.dtype.itemsize
    sub = 16 if min(x_bytes, out_bytes) == 2 else 8   # sublane multiple

    cap = _vmem_capacity_bytes()
    budget = min(int(cap * 0.55), 64 * 1024 * 1024)   # ~35 MiB v7x, 64 MiB v5e/v6e

    n_out = _choose_out_width(n)
    tk = _choose_block_k(k, n_out, w_bytes, budget)
    grid_k = k // tk if k % tk == 0 else 1
    if grid_k * tk != k:                               # only split evenly
        tk, grid_k = k, 1

    use_scratch = (grid_k > 1) and (out_dtype != jnp.float32)

    m_al = _round_up(m, sub)                           # tiny sublane-only pad
    tm = _choose_block_m(m_al, tk, n_out, x_bytes, out_bytes, w_bytes,
                         use_scratch, sub, budget)
    grid_m = pl.cdiv(m_al, tm)

    # Layout plumbing (all fused inside the surrounding jit; compiles away
    # when the shapes are already aligned).
    # TODO(synk): for pure inference, cache the transposed/padded weight once
    # instead of re-deriving it on every call.
    w_t = weight.T                                     # (k, n)
    xp = jnp.pad(x2d, ((0, m_al - m), (0, 0))) if m_al != m else x2d
    if n_out != n:
        w_t = jnp.pad(w_t, ((0, 0), (0, n_out - n)))
        b2d = jnp.pad(bias, (0, n_out - n)).reshape(1, n_out)
    else:
        b2d = bias.reshape(1, n_out)

    # VMEM limit that actually covers the chosen tiles (generation-aware).
    n_lane = _round_up(n_out, 128)
    est_vmem = (2 * _round_up(tk, 8) * n_lane * w_bytes
                + 2 * 8 * n_lane * 4
                + 2 * tm * _round_up(tk, 128) * x_bytes
                + 2 * tm * n_lane * out_bytes
                + (tm * n_lane * 4 if use_scratch else 0))
    vmem_limit = int(min(cap * 0.92,
                         max(est_vmem + 8 * 1024 * 1024, 32 * 1024 * 1024)))

    weight_streams = grid_m if grid_k > 1 else 1       # re-streamed only if split
    cost = pl.CostEstimate(
        flops=2 * m_al * k * n_out,
        transcendentals=0,
        bytes_accessed=(x_bytes * m_al * k
                        + w_bytes * k * n_out * weight_streams
                        + out_bytes * m_al * n_out),
    )

    if grid_k == 1:
        kernel = _linear_single_kernel
        scratch_shapes = []
    elif not use_scratch:
        kernel = _linear_acc_inplace_kernel
        scratch_shapes = []
    else:
        kernel = _linear_acc_scratch_kernel
        scratch_shapes = [pltpu.VMEM((tm, n_out), jnp.float32)]

    y = pl.pallas_call(
        kernel,
        out_shape=jax.ShapeDtypeStruct((m_al, n_out), out_dtype),
        grid_spec=pltpu.PrefetchScalarGridSpec(
            num_scalar_prefetch=0,
            grid=(grid_m, grid_k),
            in_specs=[
                pl.BlockSpec((tm, tk), lambda i, kk: (i, kk)),
                pl.BlockSpec((tk, n_out), lambda i, kk: (kk, 0)),
                pl.BlockSpec((1, n_out), lambda i, kk: (0, 0)),
            ],
            out_specs=pl.BlockSpec((tm, n_out), lambda i, kk: (i, 0)),
            scratch_shapes=scratch_shapes,
        ),
        compiler_params=pltpu.CompilerParams(
            dimension_semantics=("parallel", "arbitrary"),
            vmem_limit_bytes=vmem_limit,
        ),
        cost_estimate=cost,
    )(xp, w_t, b2d)

    if m_al != m:
        y = y[:m]
    if n_out != n:
        y = y[:, :n]
    return y


@functools.partial(jax.jit, static_argnames=("batch_first",))
def time_distributed_linear(x, weight, bias, *, batch_first=False):
    """TimeDistributed(nn.Linear(in_f, out_f), batch_first).forward(x).

    weight: (out_features, in_features)  -- PyTorch nn.Linear convention
    bias:   (out_features,)
    """
    out_features = weight.shape[0]

    if x.ndim <= 2:
        # nn.Linear accepts 1-D or 2-D input directly; lift 1-D to a row.
        x2d = x.reshape(1, -1) if x.ndim == 1 else x
        y = _linear_pallas(x2d, weight, bias)
        return y.reshape(-1) if x.ndim == 1 else y

    # x.contiguous().view(-1, x.size(-1))
    x2d = x.reshape(-1, x.shape[-1])
    y = _linear_pallas(x2d, weight, bias)

    if batch_first:
        # y.view(x.size(0), -1, y.size(-1))
        return y.reshape(x.shape[0], -1, out_features)
    # y.view(-1, x.size(1), y.size(-1))
    return y.reshape(-1, x.shape[1], out_features)


if __name__ == "__main__":
    key = jax.random.PRNGKey(0)
    k_x, k_w, k_b = jax.random.split(key, 3)

    batch, seq, in_features, out_features = 2, 8, 32, 16

    x = jax.random.normal(k_x, (batch, seq, in_features), dtype=jnp.float32)
    # Deterministic nn.Linear-style parameters (uniform in +-1/sqrt(in)).
    bound = 1.0 / (in_features ** 0.5)
    weight = jax.random.uniform(k_w, (out_features, in_features),
                                minval=-bound, maxval=bound, dtype=jnp.float32)
    bias = jax.random.uniform(k_b, (out_features,),
                              minval=-bound, maxval=bound, dtype=jnp.float32)

    y_ref3 = (x.reshape(-1, in_features) @ weight.T + bias).reshape(
        batch, seq, out_features)

    # 3-D path, batch_first=True (as used in BLSTM.py).
    y = jax.block_until_ready(
        time_distributed_linear(x, weight, bias, batch_first=True))
    assert y.shape == (batch, seq, out_features), y.shape
    assert jnp.allclose(y, y_ref3, atol=1e-5, rtol=1e-5)

    # 3-D path, batch_first=False branch.
    yf = jax.block_until_ready(
        time_distributed_linear(x, weight, bias, batch_first=False))
    assert yf.shape == (batch, seq, out_features), yf.shape
    assert jnp.allclose(yf, y_ref3, atol=1e-5, rtol=1e-5)

    # 2-D passthrough path (len(x.size()) <= 2 branch).
    x2 = x[0]                                      # (seq, in_features)
    y2 = jax.block_until_ready(
        time_distributed_linear(x2, weight, bias, batch_first=True))
    y2_ref = x2 @ weight.T + bias
    assert y2.shape == (seq, out_features), y2.shape
    assert jnp.allclose(y2, y2_ref, atol=1e-5, rtol=1e-5)

    print("KERNEL_OK")
</pallas_src>

<mosaic_0001>
module attributes {stable_mosaic.version = 11 : i64} {
  func.func @_linear_single_kernel(%arg0: i32, %arg1: i32, %arg2: memref<8x32xf32, #tpu.memory_space<vmem>>, %arg3: memref<32x16xf32, #tpu.memory_space<vmem>>, %arg4: memref<1x16xf32, #tpu.memory_space<vmem>>, %arg5: memref<8x16xf32, #tpu.memory_space<vmem>>) attributes {dimension_semantics = [#tpu.dimension_semantics<parallel>, #tpu.dimension_semantics<arbitrary>], iteration_bounds = array<i64: 2, 1>, scalar_prefetch = 0 : i64, scratch_operands = 0 : i64, tpu.core_type = #tpu.core_type<tc>, window_params = [{transform_indices = @transform_0, window_bounds = array<i64: 8, 32>}, {transform_indices = @transform_1, window_bounds = array<i64: 32, 16>}, {pipeline_mode = #tpu.pipeline_mode<synchronous>, transform_indices = @transform_2, window_bounds = array<i64: 1, 16>}, {transform_indices = @transform_3, window_bounds = array<i64: 8, 16>}]} {
    %c0 = arith.constant 0 : index
    %c0_0 = arith.constant 0 : index
    %0 = vector.load %arg2[%c0, %c0_0] : memref<8x32xf32, #tpu.memory_space<vmem>>, vector<8x32xf32>
    %c0_1 = arith.constant 0 : index
    %c0_2 = arith.constant 0 : index
    %1 = vector.load %arg3[%c0_1, %c0_2] : memref<32x16xf32, #tpu.memory_space<vmem>>, vector<32x16xf32>
    %cst = arith.constant dense<0.000000e+00> : vector<8x16xf32>
    %2 = tpu.matmul %0, %1, %cst {dimension_numbers = #tpu.dot_dimension_numbers<[1], [0], [0], [1], [0, 0, 1, 1], [], []>} : vector<8x32xf32>, vector<32x16xf32>, vector<8x16xf32> -> vector<8x16xf32>
    %c0_3 = arith.constant 0 : index
    %c0_4 = arith.constant 0 : index
    %3 = vector.load %arg4[%c0_3, %c0_4] : memref<1x16xf32, #tpu.memory_space<vmem>>, vector<1x16xf32>
    %4 = vector.broadcast %3 : vector<1x16xf32> to vector<8x16xf32>
    %5 = arith.addf %2, %4 : vector<8x16xf32>
    %c0_5 = arith.constant 0 : index
    %c0_6 = arith.constant 0 : index
    %6 = vector.load %arg5[%c0_5, %c0_6] : memref<8x16xf32, #tpu.memory_space<vmem>>, vector<8x16xf32>
    tpu.vector_store %arg5[%c0_5, %c0_6], %5 {strides = array<i32>} : memref<8x16xf32, #tpu.memory_space<vmem>>, vector<8x16xf32>,
    return
  }
  func.func @transform_0(%arg0: i32, %arg1: i32) -> (i32, i32) {
    %c0_i32 = arith.constant 0 : i32
    return %arg0, %arg1 : i32, i32
  }
  func.func @transform_1(%arg0: i32, %arg1: i32) -> (i32, i32) {
    %c0_i32 = arith.constant 0 : i32
    %c0_i32_0 = arith.constant 0 : i32
    return %arg1, %c0_i32 : i32, i32
  }
  func.func @transform_2(%arg0: i32, %arg1: i32) -> (i32, i32) {
    %c0_i32 = arith.constant 0 : i32
    %c0_i32_0 = arith.constant 0 : i32
    %c0_i32_1 = arith.constant 0 : i32
    return %c0_i32, %c0_i32_0 : i32, i32
  }
  func.func @transform_3(%arg0: i32, %arg1: i32) -> (i32, i32) {
    %c0_i32 = arith.constant 0 : i32
    %c0_i32_0 = arith.constant 0 : i32
    return %arg0, %c0_i32 : i32, i32
  }
}

</mosaic_0001>

<llo_original>
// kernel: time_distributed_linear.1
$region0: #{time_distributed_linear.1}
  #allocation0 [shape = 'u32[]', space=smem, size = 0x4, offset = 0x4, fixed_abs, tag = 'smem constant byte address 0x4 - core index']
  #allocation1 [shape = 'u32[72,128]{1,0:T(1,128)}', space=vmem, size = 0x9000, scoped, tag = 'internal scratch']
  %s0 = inlined_call_operand.vmem [shape: f32[16,32], index: 0, kind: input, shape index: {}]
  %s1 = inlined_call_operand.vmem [shape: f32[32,16], index: 1, kind: input, shape index: {}]
  %s2 = inlined_call_operand.vmem [shape: f32[1,16], index: 2, kind: input, shape index: {}]
  %s3 = inlined_call_operand.hbm [shape: f32[16,16], index: 3, kind: output, shape index: {}]
  %s4 = sld [smem:[#allocation0]]
  $region45: #{time_distributed_linear.1} parent=0
    _
  %s6 = ssub.s32 1, %s4
  %s7 = scalar_select 0, %s6, %s4
  $region1: #{time_distributed_linear.1} parent=0
    #allocation2 [shape = 'u8[8192]{0}', space=vmem, size = 0x2000, scoped, tag = 'output window, operand 0']
    #allocation3 [shape = 's32[2]{0}', space=sflag, size = 0x8, scoped, tag = 'scoped memory for time_distributed_linear.1']
    %8 = vsyncpa [#allocation3], 0
    %s9 = scalar_lea.sflag [#allocation3], 1
    %10 = vsyncpa %s9, 0
    loop: start=0, step=1, limit=4
    $region2: #{time_distributed_linear.1} parent=1 // loop_pre_header
      _
    $region3: #{time_distributed_linear.1} parent=1 // loop_header
      %s12 = sphi 0, %s16
      %p13 = scmp.ge.s32.totalorder %s12, 4
      %s19 = sphi 0, %s31
      %s20 = sphi 0, %s27
      %s21 = sphi 0, %s19
      %s22 = sphi 0, %s20
      %s23 = sphi 0, %s21
      %s24 = sphi 0, %s22
      %s36 = sphi 0, %s38
      %s39 = sphi 0, %s36
      %s40 = sphi 0, %s39
      %s56 = sphi 0, %s40
      %s62 = sphi 0, %s64
      %s65 = sphi 0, %s62
      %s66 = sphi 0, %s65
      %s82 = sphi 0, %s66
      %s86 = sphi 0, %s86
      %s88 = sphi 0, %s86
      %s89 = sphi 0, %s88
      %s103 = sphi 0, %s89
      %s109 = sphi 0, %s111
      %s112 = sphi 0, %s109
      %s113 = sphi 0, %s112
      %s129 = sphi 0, %s113
    $region4: #{time_distributed_linear.1} parent=1 // loop_header_branch
      %15 = sbr.rel (%p13) target = $region8
    $region5: #{time_distributed_linear.1} parent=1 // loop_body
      %s17 = ssub.s32 %s12, 1
      %s18 = ssub.s32 %s12, 2
      %s25 = sadd.s32 1, %s20
      %p26 = scmp.ge.s32.totalorder %s25, 1
      %s27 = scalar_select %p26, 0, %s25
      %s28 = sadd.s32 1, %s19
      %s29 = scalar_select %p26, %s28, %s19
      %p30 = scmp.ge.s32.totalorder %s29, 2
      %s31 = scalar_select %p30, 0, %s29
      %s32 = ssub.s32 %s19, %s31
      %s33 = ssub.s32 %s20, %s27
      %s34 = sor.u32 %s32, %s33
      %p35 = scmp.eq.s32.totalorder %s34, 0
      %s37 = sadd.s32 %s36, 1
      %s38 = scalar_select %p35, %s36, %s37
      %p41 = pneg %p35
      %p42 = scmp.eq.s32.totalorder %s12, 1
      %p43 = por %p41, %p42
      %p44 = scmp.ne.s32.totalorder %s36, %s39
      %p45 = scmp.eq.s32.totalorder %s12, 0
      %p46 = por %p44, %p45
      %p47 = scmp.ne.s32.totalorder %s36, %s39
      %p48 = scmp.eq.s32.totalorder %s17, 1
      %p49 = por %p47, %p48
      %p50 = scmp.ne.s32.totalorder %s39, %s40
      %p51 = scmp.eq.s32.totalorder %s17, 0
      %p52 = por %p50, %p51
      %p53 = scmp.ne.s32.totalorder %s39, %s40
      %p54 = scmp.eq.s32.totalorder %s18, 1
      %p55 = por %p53, %p54
      %p57 = scmp.ne.s32.totalorder %s40, %s56
      %p58 = scmp.eq.s32.totalorder %s18, 0
      %p59 = por %p57, %p58
      %s60 = ssub.s32 %s20, %s27
      %p61 = scmp.eq.s32.totalorder %s60, 0
      %s63 = sadd.s32 %s62, 1
      %s64 = scalar_select %p61, %s62, %s63
      %p67 = pneg %p61
      %p68 = scmp.eq.s32.totalorder %s12, 1
      %p69 = por %p67, %p68
      %p70 = scmp.ne.s32.totalorder %s62, %s65
      %p71 = scmp.eq.s32.totalorder %s12, 0
      %p72 = por %p70, %p71
      %p73 = scmp.ne.s32.totalorder %s62, %s65
      %p74 = scmp.eq.s32.totalorder %s17, 1
      %p75 = por %p73, %p74
      %p76 = scmp.ne.s32.totalorder %s65, %s66
      %p77 = scmp.eq.s32.totalorder %s17, 0
      %p78 = por %p76, %p77
      %p79 = scmp.ne.s32.totalorder %s65, %s66
      %p80 = scmp.eq.s32.totalorder %s18, 1
      %p81 = por %p79, %p80
      %p83 = scmp.ne.s32.totalorder %s66, %s82
      %p84 = scmp.eq.s32.totalorder %s18, 0
      %p85 = por %p83, %p84
      %s87 = sadd.s32 %s86, 1
      %p90 = scmp.eq.s32.totalorder %s12, 1
      %p91 = scmp.ne.s32.totalorder %s86, %s88
      %p92 = scmp.eq.s32.totalorder %s12, 0
      %p93 = por %p91, %p92
      %p94 = scmp.ne.s32.totalorder %s86, %s88
      %p95 = scmp.eq.s32.totalorder %s17, 1
      %p96 = por %p94, %p95
      %p97 = scmp.ne.s32.totalorder %s88, %s89
      %p98 = scmp.eq.s32.totalorder %s17, 0
      %p99 = por %p97, %p98
      %p100 = scmp.ne.s32.totalorder %s88, %s89
      %p101 = scmp.eq.s32.totalorder %s18, 1
      %p102 = por %p100, %p101
      %p104 = scmp.ne.s32.totalorder %s89, %s103
      %p105 = scmp.eq.s32.totalorder %s18, 0
      %p106 = por %p104, %p105
      %s107 = ssub.s32 %s19, %s31
      %p108 = scmp.eq.s32.totalorder %s107, 0
      %s110 = sadd.s32 %s109, 1
      %s111 = scalar_select %p108, %s109, %s110
      %p114 = pneg %p108
      %p115 = scmp.eq.s32.totalorder %s12, 1
      %p116 = por %p114, %p115
      %p117 = scmp.ne.s32.totalorder %s109, %s112
      %p118 = scmp.eq.s32.totalorder %s12, 0
      %p119 = por %p117, %p118
      %p120 = scmp.ne.s32.totalorder %s109, %s112
      %p121 = scmp.eq.s32.totalorder %s17, 1
      %p122 = por %p120, %p121
      %p123 = scmp.ne.s32.totalorder %s112, %s113
      %p124 = scmp.eq.s32.totalorder %s17, 0
      %p125 = por %p123, %p124
      %p126 = scmp.ne.s32.totalorder %s112, %s113
      %p127 = scmp.eq.s32.totalorder %s18, 1
      %p128 = por %p126, %p127
      %p130 = scmp.ne.s32.totalorder %s113, %s129
      %p131 = scmp.eq.s32.totalorder %s18, 0
      %p132 = por %p130, %p131
      %p133 = scmp.le.s32.totalorder 1, %s12
      %p134 = scmp.lt.s32.totalorder %s12, 3
      %p135 = pnand %p133, %p134
      %p136 = pneg %p135
      // Predicated region
      $region9: #{time_distributed_linear.1} parent=5 // pred_check
        _
      $region10: #{time_distributed_linear.1} parent=5 // pred_check_branch
        %138 = sbr.rel (%p135) target = $region12
      $region11: #{time_distributed_linear.1} parent=5 // pred_region
        %s139 = ssub.s32 %s12, 1
        // Predicated region
        $region13: #{time_distributed_linear.1} parent=11 // pred_check
          %p140 = pneg %p78
        $region14: #{time_distributed_linear.1} parent=11 // pred_check_branch
          %142 = sbr.rel (%p140) target = $region16
        $region15: #{time_distributed_linear.1} parent=11 // pred_region
          %s143 = smul.u32 4, %s22
          %p144 = scmp.lt.s32.totalorder %s143, 3
          %s145 = scalar_select %p144, %s143, 3
          %s146 = smul.addr %s145, 8
          %s147 = scalar_lea.vmem %s1, %s146
          %s148 = smul.u32 4, %s22
        $region16: #{time_distributed_linear.1} parent=11 // pred_fallthru
          _
        // Predicated region
        $region17: #{time_distributed_linear.1} parent=11 // pred_check
          %p149 = pneg %p99
        $region18: #{time_distributed_linear.1} parent=11 // pred_check_branch
          %151 = sbr.rel (%p149) target = $region20
        $region19: #{time_distributed_linear.1} parent=11 // pred_region
          _
        $region20: #{time_distributed_linear.1} parent=11 // pred_fallthru
          _
      $region12: #{time_distributed_linear.1} parent=5 // pred_fallthru
        _
      %p152 = scmp.lt.s32.totalorder %s12, 2
      // Predicated region
      $region21: #{time_distributed_linear.1} parent=5 // pred_check
        %p153 = pneg %p152
      $region22: #{time_distributed_linear.1} parent=5 // pred_check_branch
        %155 = sbr.rel (%p153) target = $region24
      $region23: #{time_distributed_linear.1} parent=5 // pred_region
        // Predicated region
        $region25: #{time_distributed_linear.1} parent=23 // pred_check
          %p156 = pneg %p46
        $region26: #{time_distributed_linear.1} parent=23 // pred_check_branch
          %158 = sbr.rel (%p156) target = $region28
        $region27: #{time_distributed_linear.1} parent=23 // pred_region
          %p159 = scmp.lt.s32.totalorder %s19, 1
          %s160 = scalar_select %p159, %s19, 1
          %p161 = scmp.lt.s32.totalorder %s20, 0
          %s162 = scalar_select %p161, %s20, 0
          %s163 = sadd.s32 %s162, %s160
          %s164 = smul.addr %s163, 8
          %s165 = scalar_lea.vmem %s0, %s164
        $region28: #{time_distributed_linear.1} parent=23 // pred_fallthru
          _
      $region24: #{time_distributed_linear.1} parent=5 // pred_fallthru
        _
      %p166 = scmp.le.s32.totalorder 1, %s12
      %p167 = scmp.lt.s32.totalorder %s12, 3
      %p168 = pnand %p166, %p167
      %p169 = pneg %p168
      // Predicated region
      $region29: #{time_distributed_linear.1} parent=5 // pred_check
        _
      $region30: #{time_distributed_linear.1} parent=5 // pred_check_branch
        %171 = sbr.rel (%p168) target = $region32
      $region31: #{time_distributed_linear.1} parent=5 // pred_region
        %s172 = ssub.s32 %s12, 1
        %p173 = scmp.lt.s32.totalorder %s21, 1
        %s174 = scalar_select %p173, %s21, 1
        %p175 = scmp.lt.s32.totalorder %s22, 0
        %s176 = scalar_select %p175, %s22, 0
        %s177 = sadd.s32 %s176, %s174
        %s178 = smul.addr %s177, 8
        %s179 = scalar_lea.vmem %s0, %s178
        %p180 = pneg %p52
        %p181 = pneg %p49
        %s182 = smul.u32 4, %s22
        %p183 = scmp.lt.s32.totalorder %s182, 3
        %s184 = scalar_select %p183, %s182, 3
        %s185 = smul.addr %s184, 8
        %s186 = scalar_lea.vmem %s1, %s185
        %p187 = pneg %p78
        %p188 = pneg %p75
        %p189 = pneg %p99
        %p190 = pneg %p96
        %p191 = pneg %p125
        %p192 = pneg %p122
        %s193 = sand.u32 %s112, 1
        %s194 = scalar_lea.sflag [#allocation3], %s193
        %s195 = sand.u32 %s112, 1
        %s196 = smul.addr %s195, 8
        %s197 = scalar_lea.vmem [#allocation2], %s196
        %p198 = scmp.lt.s32.totalorder %s21, 1
        %s199 = scalar_select %p198, %s21, 1
        %p200 = scmp.lt.s32.totalorder %s22, 0
        %s201 = scalar_select %p200, %s22, 0
        %s202 = sadd.s32 %s201, %s199
        %s203 = smul.addr %s202, 8
        %s204 = scalar_lea.vmem %s0, %s203
        %s205 = smul.u32 4, %s22
        %p206 = scmp.lt.s32.totalorder %s205, 3
        %s207 = scalar_select %p206, %s205, 3
        %s208 = smul.addr %s207, 8
        %s209 = scalar_lea.vmem %s1, %s208
        %s210 = smul.u32 4, %s22
        %v211 = vld [vmem:[%s204] sm:$0xff]
        %v212 = vld [vmem:[%s209] sm:$0xff]
        %v213 = vld [vmem:[%s209 + $0x8] sm:$0xff]
        %v214 = vld [vmem:[%s209 + $0x10] sm:$0xff]
        %v215 = vld [vmem:[%s209 + $0x18] sm:$0xff]
        %v216 = vld [vmem:[%s2] sm:$0x1]
        %v218 = vperm.slane %v216, 0
        %vm220 = vcmask 261120
        %v222 = vsel %vm220, %v211, 0
        %224 = vmatpush.msra.mxu0 0.0
        %225 = vmatpush.msra.mxu0 0.0
        %226 = vmatpush.msra.mxu0 0.0
        %227 = vmatpush.msra.mxu0 0.0
        %228 = vmatpush.msra.mxu0 0.0
        %229 = vmatpush.msra.mxu0 0.0
        %230 = vmatpush.msra.mxu0 0.0
        %231 = vmatpush.msra.mxu0 0.0
        %232 = vmatpush.msra.mxu0 0.0
        %233 = vmatpush.msra.mxu0 0.0
        %234 = vmatpush.msra.mxu0 0.0
        %235 = vmatpush.msra.mxu0 0.0
        %236 = vmatpush.msra.mxu0 %v215
        %237 = vmatpush.msra.mxu0 %v214
        %238 = vmatpush.msra.mxu0 %v213
        %239 = vmatpush.msra.mxu0 %v212
        %240 = vmatmul.f32.gmra.mxu0 %v222
        %v241 = vpop.f32.mrf.mxu0
        %v242 = vadd.f32 %v218, %v241
        %243 = vdwg.mxu0
        %vm244 = vcmask 130048
        %245 = vst.msk [vmem:[%s197] sm:$0xff] %vm244, %v242
        %s246 = sand.u32 %s112, 1
        %s247 = scalar_lea.sflag [#allocation3], %s246
        %s248 = sand.u32 %s112, 1
        %s249 = smul.addr %s248, 8
        %s250 = scalar_lea.vmem [#allocation2], %s249
        // Predicated region
        $region33: #{time_distributed_linear.1} parent=31 // pred_check
          %p251 = pneg %p122
        $region34: #{time_distributed_linear.1} parent=31 // pred_check_branch
          %253 = sbr.rel (%p251) target = $region36
        $region35: #{time_distributed_linear.1} parent=31 // pred_region
          %255 = vsyncadd %s247, 0
          %s256 = smul.addr %s21, 8
          %s257 = scalar_lea.hbm %s3, %s256
          %s259 = sshll.u32 %s250, 4
          %s260 = int_to_ptr.vmem [resolvable:$true] %s259
          %s261 = sshll.u32 %s257, 4
          %s262 = int_to_ptr.hbm [resolvable:$true] %s261
          %264 = dma.vmem_to_hbm [thread:$0]  %s260, 128, %s262, %s247
        $region36: #{time_distributed_linear.1} parent=31 // pred_fallthru
          _
      $region32: #{time_distributed_linear.1} parent=5 // pred_fallthru
        _
      %p265 = scmp.le.s32.totalorder 2, %s12
      // Predicated region
      $region37: #{time_distributed_linear.1} parent=5 // pred_check
        %p266 = pneg %p265
      $region38: #{time_distributed_linear.1} parent=5 // pred_check_branch
        %268 = sbr.rel (%p266) target = $region40
      $region39: #{time_distributed_linear.1} parent=5 // pred_region
        %s269 = ssub.s32 %s12, 2
        // Predicated region
        $region41: #{time_distributed_linear.1} parent=39 // pred_check
          %p270 = pneg %p128
        $region42: #{time_distributed_linear.1} parent=39 // pred_check_branch
          %272 = sbr.rel (%p270) target = $region44
        $region43: #{time_distributed_linear.1} parent=39 // pred_region
          %s273 = sand.u32 %s113, 1
          %s274 = scalar_lea.sflag [#allocation3], %s273
          %s275 = sand.u32 %s113, 1
          %s276 = smul.addr %s275, 8
          %s277 = scalar_lea.vmem [#allocation2], %s276
          %279 = dma.done %s274, 128
        $region44: #{time_distributed_linear.1} parent=39 // pred_fallthru
          _
      $region40: #{time_distributed_linear.1} parent=5 // pred_fallthru
        _
    $region6: #{time_distributed_linear.1} parent=1 // loop_footer
      %s16 = sadd.s32 1, %s12
    $region7: #{time_distributed_linear.1} parent=1 // loop_footer_branch
      %11 = sbr.rel target = $region3
    $region8: #{time_distributed_linear.1} parent=1 // loop_exit
      _
    %280 = vsyncpa [#allocation3], 1
    %s281 = scalar_lea.sflag [#allocation3], 1
    %282 = vsyncpa %s281, 1

</llo_original>
